<compile_context>
chip_gen: v7x
topology: tpu7x:2x2x1
jax: 0.10.0
libtpu: 0.0.40
codegen_flags: <defaults>
</compile_context>

<pallas_src>
import functools

import jax
import jax.numpy as jnp
from jax.experimental import pallas as pl
from jax.experimental.pallas import tpu as pltpu


# ----------------------------------------------------------------------------
# Kernel 1: per-row (= per (n, c) pair) mean and M2 over the spatial lane axis.
# Each grid step owns its own output block; no cross-step accumulation needed.
# ----------------------------------------------------------------------------
def _row_stats_kernel(x_ref, mean_ref, m2_ref):
    x = x_ref[...].astype(jnp.float32)
    inv_l = 1.0 / x.shape[1]
    row_mean = jnp.sum(x, axis=1, keepdims=True) * inv_l
    d = x - row_mean
    mean_ref[...] = row_mean
    m2_ref[...] = jnp.sum(d * d, axis=1, keepdims=True)


# ----------------------------------------------------------------------------
# Kernel 2: fused y = x * scale + shift, then activation (per-row scale/shift).
# ----------------------------------------------------------------------------
def _scale_shift_act_kernel(x_ref, scale_ref, shift_ref, o_ref, *,
                            act_name, act_param):
    x = x_ref[...].astype(jnp.float32)
    y = x * scale_ref[...] + shift_ref[...]          # (tr, L) * (tr, 1) + (tr, 1)
    if act_name == "leaky_relu":
        y = jnp.where(y >= 0, y, y * act_param)
    elif act_name == "elu":
        y = jnp.where(y > 0, y, act_param * (jnp.exp(jnp.minimum(y, 0.0)) - 1.0))
    elif act_name == "identity":
        pass
    else:
        raise ValueError(f"unsupported activation: {act_name}")
    o_ref[...] = y.astype(o_ref.dtype)


def _pick_row_tile(n_rows, n_lanes, itemsize, target_bytes):
    """Largest row tile (multiple of 8, or the full row count) whose input
    block stays under target_bytes."""
    rows = target_bytes // max(1, n_lanes * itemsize)
    if rows >= n_rows:
        return n_rows                      # one block spans all rows
    rows = max(8, (rows // 8) * 8)         # sublane-aligned tile
    return min(rows, n_rows)


def inplace_abn_forward(x_nchw, weight, bias, running_mean, running_var, *,
                        training=True, momentum=0.1, eps=1e-5,
                        act_name="leaky_relu", act_param=0.01,
                        target_block_bytes=4 * 1024 * 1024,
                        inplace=False):
    """Forward of InplaceAbn on an NCHW input. Returns (y_nchw, new_rm, new_rv)."""
    N, C, H, W = x_nchw.shape
    R, L = N * C, H * W
    x2d = x_nchw.reshape(R, L)             # free view: no transpose, no copy
    itemsize = jnp.dtype(x_nchw.dtype).itemsize

    tr = _pick_row_tile(R, L, itemsize, target_block_bytes)
    grid_r = pl.cdiv(R, tr)

    # In+out double-buffered blocks of the normalize pass (+ slack), floored at
    # the smallest default scoped limit and capped under v7x physical VMEM.
    blk_bytes = tr * L * 4                 # f32 worst case inside the pipeline
    vmem_limit = int(min(max(4 * blk_bytes + (2 << 20), 16 * 1024 * 1024),
                         64 * 1024 * 1024))
    cparams = pltpu.CompilerParams(
        dimension_semantics=("parallel",),     # row blocks are independent
        vmem_limit_bytes=vmem_limit)

    count = float(N * H * W)

    if training:
        # --- Pass 1: per-(n, c) row stats over the spatial axis ---------------
        row_mean, row_m2 = pl.pallas_call(
            _row_stats_kernel,
            out_shape=(jax.ShapeDtypeStruct((R, 1), jnp.float32),
                       jax.ShapeDtypeStruct((R, 1), jnp.float32)),
            grid=(grid_r,),
            in_specs=[pl.BlockSpec((tr, L), lambda i: (i, 0))],
            out_specs=(pl.BlockSpec((tr, 1), lambda i: (i, 0)),
                       pl.BlockSpec((tr, 1), lambda i: (i, 0))),
            compiler_params=cparams,
        )(x2d)

        # Tiny (N, C) cross-batch combine (parallel Welford) in plain XLA.
        rm = row_mean.reshape(N, C)
        rM2 = row_m2.reshape(N, C)
        mean_c = jnp.mean(rm, axis=0)                                   # (C,)
        m2_c = jnp.sum(rM2, axis=0) + float(L) * jnp.sum((rm - mean_c) ** 2, axis=0)
        var_biased = m2_c / count
        var_unbiased = m2_c / max(count - 1.0, 1.0)

        new_rm = ((1.0 - momentum) * running_mean.astype(jnp.float32)
                  + momentum * mean_c).astype(running_mean.dtype)
        new_rv = ((1.0 - momentum) * running_var.astype(jnp.float32)
                  + momentum * var_unbiased).astype(running_var.dtype)
        use_mean, use_var = mean_c, var_biased
    else:
        use_mean = running_mean.astype(jnp.float32)
        use_var = running_var.astype(jnp.float32)
        new_rm, new_rv = running_mean, running_var

    invstd = jax.lax.rsqrt(use_var + eps)                               # (C,)
    if weight is None:
        scale_c = invstd
        shift_c = -use_mean * invstd
    else:
        scale_c = invstd * weight.astype(jnp.float32)
        shift_c = bias.astype(jnp.float32) - use_mean * scale_c

    # Broadcast per-channel scale/shift to per-row (n, c) vectors (tiny).
    scale_r = jnp.broadcast_to(scale_c[None, :], (N, C)).reshape(R, 1)
    shift_r = jnp.broadcast_to(shift_c[None, :], (N, C)).reshape(R, 1)

    # --- Pass 2: fused normalize + affine + activation ------------------------
    kern = functools.partial(_scale_shift_act_kernel,
                             act_name=act_name, act_param=float(act_param))
    y2d = pl.pallas_call(
        kern,
        out_shape=jax.ShapeDtypeStruct((R, L), x_nchw.dtype),
        grid=(grid_r,),
        in_specs=[pl.BlockSpec((tr, L), lambda i: (i, 0)),
                  pl.BlockSpec((tr, 1), lambda i: (i, 0)),
                  pl.BlockSpec((tr, 1), lambda i: (i, 0))],
        out_specs=pl.BlockSpec((tr, L), lambda i: (i, 0)),
        compiler_params=cparams,
        # True "inplace" ABN: reuse x's HBM buffer for the output.  Only a win
        # when the caller jits + donates x (otherwise XLA inserts a defensive
        # copy), so it is opt-in.
        input_output_aliases=({0: 0} if inplace else {}),
    )(x2d, scale_r, shift_r)

    return y2d.reshape(N, C, H, W), new_rm, new_rv


if __name__ == "__main__":
    # Module config matching InplaceAbn defaults: affine, leaky_relu(0.01).
    num_features = 4
    eps = 1e-5
    momentum = 0.1
    act_param = 0.01

    # Deterministic parameters / buffers per reset_parameters().
    weight = jnp.ones((num_features,), jnp.float32)
    bias = jnp.zeros((num_features,), jnp.float32)
    running_mean = jnp.zeros((num_features,), jnp.float32)
    running_var = jnp.ones((num_features,), jnp.float32)

    # Deterministic input, NCHW as in PyTorch.
    key = jax.random.PRNGKey(0)
    x = jax.random.normal(key, (2, num_features, 16, 16), dtype=jnp.float32)

    y, new_rm, new_rv = inplace_abn_forward(
        x, weight, bias, running_mean, running_var,
        training=True, momentum=momentum, eps=eps,
        act_name="leaky_relu", act_param=act_param)
    jax.block_until_ready((y, new_rm, new_rv))

    # Reference: training-mode batch norm (biased var) + leaky_relu.
    mean_ref = jnp.mean(x, axis=(0, 2, 3), keepdims=True)
    var_ref = jnp.var(x, axis=(0, 2, 3), keepdims=True)
    y_ref = (x - mean_ref) / jnp.sqrt(var_ref + eps)
    y_ref = jnp.where(y_ref >= 0, y_ref, y_ref * act_param)
    assert jnp.max(jnp.abs(y - y_ref)) < 1e-4, "output mismatch vs reference"

    cnt = x.shape[0] * x.shape[2] * x.shape[3]
    var_unb_ref = jnp.var(x, axis=(0, 2, 3)) * (cnt / (cnt - 1))
    rm_ref = (1 - momentum) * running_mean + momentum * jnp.mean(x, axis=(0, 2, 3))
    rv_ref = (1 - momentum) * running_var + momentum * var_unb_ref
    assert jnp.max(jnp.abs(new_rm - rm_ref)) < 1e-5, "running_mean mismatch"
    assert jnp.max(jnp.abs(new_rv - rv_ref)) < 1e-5, "running_var mismatch"

    # Eval-mode path (uses running stats, skips the stats kernel entirely).
    y_eval, _, _ = inplace_abn_forward(
        x, weight, bias, running_mean, running_var,
        training=False, momentum=momentum, eps=eps,
        act_name="leaky_relu", act_param=act_param)
    jax.block_until_ready(y_eval)
    y_eval_ref = x / jnp.sqrt(1.0 + eps)
    y_eval_ref = jnp.where(y_eval_ref >= 0, y_eval_ref, y_eval_ref * act_param)
    assert jnp.max(jnp.abs(y_eval - y_eval_ref)) < 1e-4, "eval output mismatch"

    print("KERNEL_OK")
</pallas_src>

<mosaic_0001>
module attributes {stable_mosaic.version = 11 : i64} {
  func.func @_row_stats_kernel(%arg0: i32, %arg1: memref<8x256xf32, #tpu.memory_space<vmem>>, %arg2: memref<8x1xf32, #tpu.memory_space<vmem>>, %arg3: memref<8x1xf32, #tpu.memory_space<vmem>>) attributes {dimension_semantics = [#tpu.dimension_semantics<parallel>], iteration_bounds = array<i64: 1>, scalar_prefetch = 0 : i64, scratch_operands = 0 : i64, tpu.core_type = #tpu.core_type<tc>, window_params = [{transform_indices = @transform_0, window_bounds = array<i64: 8, 256>}, {transform_indices = @transform_1, window_bounds = array<i64: 8, 1>}, {transform_indices = @transform_2, window_bounds = array<i64: 8, 1>}]} {
    %c0 = arith.constant 0 : index
    %c0_0 = arith.constant 0 : index
    %0 = vector.load %arg1[%c0, %c0_0] : memref<8x256xf32, #tpu.memory_space<vmem>>, vector<8x256xf32>
    %cst = arith.constant dense<0.000000e+00> : vector<8xf32>
    %1 = vector.multi_reduction <add>, %0, %cst [1] : vector<8x256xf32> to vector<8xf32>
    %2 = vector.shape_cast %1 : vector<8xf32> to vector<8x1xf32>
    %cst_1 = arith.constant 3.906250e-03 : f32
    %3 = vector.broadcast %cst_1 : f32 to vector<8x1xf32>
    %4 = arith.mulf %2, %3 : vector<8x1xf32>
    %5 = vector.broadcast %4 : vector<8x1xf32> to vector<8x256xf32>
    %6 = arith.subf %0, %5 : vector<8x256xf32>
    %c0_2 = arith.constant 0 : index
    %c0_3 = arith.constant 0 : index
    %7 = vector.load %arg2[%c0_2, %c0_3] : memref<8x1xf32, #tpu.memory_space<vmem>>, vector<8x1xf32>
    tpu.vector_store %arg2[%c0_2, %c0_3], %4 {strides = array<i32>} : memref<8x1xf32, #tpu.memory_space<vmem>>, vector<8x1xf32>,
    %8 = arith.mulf %6, %6 : vector<8x256xf32>
    %cst_4 = arith.constant dense<0.000000e+00> : vector<8xf32>
    %9 = vector.multi_reduction <add>, %8, %cst_4 [1] : vector<8x256xf32> to vector<8xf32>
    %10 = vector.shape_cast %9 : vector<8xf32> to vector<8x1xf32>
    %c0_5 = arith.constant 0 : index
    %c0_6 = arith.constant 0 : index
    %11 = vector.load %arg3[%c0_5, %c0_6] : memref<8x1xf32, #tpu.memory_space<vmem>>, vector<8x1xf32>
    tpu.vector_store %arg3[%c0_5, %c0_6], %10 {strides = array<i32>} : memref<8x1xf32, #tpu.memory_space<vmem>>, vector<8x1xf32>,
    return
  }
  func.func @transform_0(%arg0: i32) -> (i32, i32) {
    %c0_i32 = arith.constant 0 : i32
    %c0_i32_0 = arith.constant 0 : i32
    return %arg0, %c0_i32 : i32, i32
  }
  func.func @transform_1(%arg0: i32) -> (i32, i32) {
    %c0_i32 = arith.constant 0 : i32
    %c0_i32_0 = arith.constant 0 : i32
    return %arg0, %c0_i32 : i32, i32
  }
  func.func @transform_2(%arg0: i32) -> (i32, i32) {
    %c0_i32 = arith.constant 0 : i32
    %c0_i32_0 = arith.constant 0 : i32
    return %arg0, %c0_i32 : i32, i32
  }
}

</mosaic_0001>

<llo_original>
// kernel: tpu_custom_call.1
$region0: #{tpu_custom_call.1}
  #allocation0 [shape = 'u32[]', space=smem, size = 0x4, offset = 0x4, fixed_abs, tag = 'smem constant byte address 0x4 - core index']
  #allocation1 [shape = 'u32[144,128]{1,0:T(1,128)}', space=vmem, size = 0x12000, scoped, tag = 'internal scratch']
  %s0 = inlined_call_operand.hbm [shape: f32[8,256], index: 0, kind: input, shape index: {}]
  %s1 = inlined_call_operand.vmem [shape: f32[8,1], index: 1, kind: output, shape index: {0}]
  %s2 = inlined_call_operand.vmem [shape: f32[8,1], index: 2, kind: output, shape index: {1}]
  %3 = xla_tuple %s1, %s2
  %s4 = sld [smem:[#allocation0]]
  $region26: #{tpu_custom_call.1} parent=0
    _
  %s6 = ssub.s32 1, %s4
  %s7 = scalar_select 0, %s6, %s4
  $region1: #{tpu_custom_call.1} parent=0
    #allocation2 [shape = 'u8[8192]{0}', space=vmem, size = 0x2000, scoped, tag = 'input window, operand 0, single buffered']
    #allocation3 [shape = 's32[1]{0}', space=sflag, size = 0x4, scoped, tag = 'scoped memory for tpu_custom_call.1']
    %8 = vsyncpa [#allocation3], 0
    // Predicated region
    $region2: #{tpu_custom_call.1} parent=1 // pred_check
      _
    $region3: #{tpu_custom_call.1} parent=1 // pred_check_branch
      %10 = sbr.rel (0) target = $region5
    $region4: #{tpu_custom_call.1} parent=1 // pred_region
      %s12 = ssub.s32 256, 256
      %13 = vsyncadd [#allocation3], %s12
      %s15 = sshll.u32 [#allocation2], 4
      %s16 = int_to_ptr.vmem [resolvable:$true] %s15
      %18 = dma.hbm_to_vmem [thread:$0]  %s0, 256, %s16, [#allocation3]
    $region5: #{tpu_custom_call.1} parent=1 // pred_fallthru
      _
    // Predicated region
    $region6: #{tpu_custom_call.1} parent=1 // pred_check
      _
    $region7: #{tpu_custom_call.1} parent=1 // pred_check_branch
      %20 = sbr.rel (0) target = $region9
    $region8: #{tpu_custom_call.1} parent=1 // pred_region
      %21 = dma.done [#allocation3], 256
    $region9: #{tpu_custom_call.1} parent=1 // pred_fallthru
      _
    %v22 = vld [vmem:[#allocation2] sm:$0xff]
    %v23 = vld [vmem:[#allocation2 + $0x8] sm:$0xff]
    %v24 = vadd.f32 %v22, %v23
    %25 = vadd.xlane.f32.xlu0 %v24
    %v26 = vpop.xlane.xlu0 %25
    %v27 = vmul.f32 %v26, 0.00390625
    %v28 = vsub.f32 %v22, %v27
    %v29 = vsub.f32 %v23, %v27
    %vm30 = vcmask 7168
    %31 = vst.msk [vmem:[%s1] sm:$0xff] %vm30, %v27
    %v32 = vmul.f32 %v28, %v28
    %v33 = vmul.f32 %v29, %v29
    %v34 = vadd.f32 %v32, %v33
    %35 = vadd.xlane.f32.xlu0 %v34
    %v36 = vpop.xlane.xlu0 %35
    %37 = vst.msk [vmem:[%s2] sm:$0xff] %vm30, %v36
    // Predicated region
    $region10: #{tpu_custom_call.1} parent=1 // pred_check
      _
    $region11: #{tpu_custom_call.1} parent=1 // pred_check_branch
      %39 = sbr.rel (0) target = $region13
    $region12: #{tpu_custom_call.1} parent=1 // pred_region
      _
    $region13: #{tpu_custom_call.1} parent=1 // pred_fallthru
      _
    // Predicated region
    $region14: #{tpu_custom_call.1} parent=1 // pred_check
      _
    $region15: #{tpu_custom_call.1} parent=1 // pred_check_branch
      %41 = sbr.rel (0) target = $region17
    $region16: #{tpu_custom_call.1} parent=1 // pred_region
      _
    $region17: #{tpu_custom_call.1} parent=1 // pred_fallthru
      _
    // Predicated region
    $region18: #{tpu_custom_call.1} parent=1 // pred_check
      _
    $region19: #{tpu_custom_call.1} parent=1 // pred_check_branch
      %43 = sbr.rel (0) target = $region21
    $region20: #{tpu_custom_call.1} parent=1 // pred_region
      _
    $region21: #{tpu_custom_call.1} parent=1 // pred_fallthru
      _
    // Predicated region
    $region22: #{tpu_custom_call.1} parent=1 // pred_check
      _
    $region23: #{tpu_custom_call.1} parent=1 // pred_check_branch
      %45 = sbr.rel (0) target = $region25
    $region24: #{tpu_custom_call.1} parent=1 // pred_region
      _
    $region25: #{tpu_custom_call.1} parent=1 // pred_fallthru
      _
    %46 = vsyncpa [#allocation3], 1

</llo_original>
